<compile_context>
chip_gen: v7x
topology: tpu7x:2x2x1
jax: 0.10.0
libtpu: 0.0.40
codegen_flags: <defaults>
</compile_context>

<pallas_src>
import functools

import jax
import jax.numpy as jnp
from jax.experimental import pallas as pl
from jax.experimental.pallas import tpu as pltpu


def _round_up(n: int, m: int) -> int:
    return ((n + m - 1) // m) * m


def _value_net_kernel(x_ref, w1_ref, b1_ref, w2_ref, b2_ref, w3_ref, b3_ref,
                      o_ref, *, n_features: int, l1_on_vpu: bool):
    # ----- Layer 1 -----
    if l1_on_vpu:
        # Small fan-in: unrolled VPU multiply-accumulate in f32.  No MXU pushes
        # and no bf16 cast of x / w1.
        acc = x_ref[:, 0:1] * w1_ref[0:1, :]
        for s in range(1, n_features):
            acc = acc + x_ref[:, s:s + 1] * w1_ref[s:s + 1, :]
    else:
        # Large fan-in: MXU matmul, bf16 operands (x cast in-kernel), f32 acc.
        acc = jnp.dot(x_ref[...].astype(jnp.bfloat16), w1_ref[...],
                      preferred_element_type=jnp.float32)
    h1 = jnp.maximum(acc + b1_ref[...], 0.0)

    # ----- Layer 2: (TB,128)bf16 @ (128,128)bf16 -> f32 acc; bias+ReLU in f32 -----
    h2 = jnp.dot(h1.astype(jnp.bfloat16), w2_ref[...],
                 preferred_element_type=jnp.float32)
    h2 = jnp.maximum(h2 + b2_ref[...], 0.0)

    # ----- Layer 3: VPU multiply + lane reduction (w3 is a (1,128) f32 row) -----
    out = jnp.sum(h2 * w3_ref[...], axis=-1, keepdims=True)
    o_ref[...] = out + b3_ref[...]


def value_net_forward(x, w1, b1, w2, b2, w3, b3, *, tb: int = 1024):
    """ValueNet forward.

    x:  (B, state_size) float32
    w1: (state_size, 128), b1: (128,) or (1, 128)
    w2: (128, 128),        b2: (128,) or (1, 128)
    w3: (128, 1),          b3: (1,) or (1, 1)
    Returns (B, 1) float32.
    """
    B, S = x.shape
    H = w1.shape[1]
    l1_on_vpu = S <= 32

    # Pad batch only to the sublane multiple (8); ragged tail vs. the tile is
    # handled by a cdiv grid (boundary block is masked by Pallas).
    b_pad = _round_up(max(B, 1), 8)
    x_p = x.astype(jnp.float32)
    if b_pad != B:
        x_p = jnp.pad(x_p, ((0, b_pad - B), (0, 0)))

    # Batch tile: multiple of 8, never larger than the (padded) batch.
    tb = min(_round_up(max(tb, 8), 8), b_pad)
    # v7x megacore guard: keep >= 2 grid steps when there is enough work.
    if b_pad >= 1024 and pl.cdiv(b_pad, tb) < 2:
        tb = _round_up(pl.cdiv(b_pad, 2), 8)
    grid = (pl.cdiv(b_pad, tb),)

    # Operand preparation (weights are tiny; these casts/reshapes are negligible).
    w1_in = w1.astype(jnp.float32) if l1_on_vpu else w1.astype(jnp.bfloat16)
    w2_bf = w2.astype(jnp.bfloat16)
    b1_2d = jnp.reshape(b1, (1, H)).astype(jnp.float32)
    b2_2d = jnp.reshape(b2, (1, H)).astype(jnp.float32)
    w3_row = jnp.reshape(w3, (1, H)).astype(jnp.float32)
    b3_11 = jnp.reshape(b3, (1, 1)).astype(jnp.float32)

    def resident(arr):
        # Same block every grid step -> stays resident in VMEM.
        return pl.BlockSpec(arr.shape, lambda i: (0, 0))

    flops = 2 * b_pad * (S * H + H * H + H)
    bytes_accessed = 4 * b_pad * (S + 1) + 4 * (S * H + H * H + 3 * H + 1)

    kernel = functools.partial(_value_net_kernel, n_features=S,
                               l1_on_vpu=l1_on_vpu)

    out = pl.pallas_call(
        kernel,
        out_shape=jax.ShapeDtypeStruct((b_pad, 1), jnp.float32),
        grid=grid,
        in_specs=[
            pl.BlockSpec((tb, S), lambda i: (i, 0)),   # x: tiled over batch
            resident(w1_in),
            resident(b1_2d),
            resident(w2_bf),
            resident(b2_2d),
            resident(w3_row),
            resident(b3_11),
        ],
        out_specs=pl.BlockSpec((tb, 1), lambda i: (i, 0)),
        compiler_params=pltpu.CompilerParams(
            dimension_semantics=("parallel",)),        # megacore on v7x
        cost_estimate=pl.CostEstimate(flops=flops, transcendentals=0,
                                      bytes_accessed=bytes_accessed),
    )(x_p, w1_in, b1_2d, w2_bf, b2_2d, w3_row, b3_11)

    return out[:B]


def init_params(key, state_size: int):
    """Deterministic init mirroring nn.Linear defaults (U[-1/sqrt(fan_in), 1/sqrt(fan_in)])."""
    ks = jax.random.split(key, 6)

    def linear(kw, kb, fan_in, fan_out):
        bound = 1.0 / jnp.sqrt(jnp.float32(fan_in))
        # Stored as (in, out) so the kernel computes x @ W + b.
        w = jax.random.uniform(kw, (fan_in, fan_out), jnp.float32, -bound, bound)
        b = jax.random.uniform(kb, (1, fan_out), jnp.float32, -bound, bound)
        return w, b

    w1, b1 = linear(ks[0], ks[1], state_size, 128)
    w2, b2 = linear(ks[2], ks[3], 128, 128)
    w3, b3 = linear(ks[4], ks[5], 128, 1)
    return w1, b1, w2, b2, w3, b3


def _reference_f32(x, params):
    """Plain-JAX f32 reference (same math as the PyTorch forward)."""
    w1, b1, w2, b2, w3, b3 = params
    h1 = jnp.maximum(x @ w1 + b1, 0.0)
    h2 = jnp.maximum(h1 @ w2 + b2, 0.0)
    return h2 @ w3 + b3


if __name__ == "__main__":
    key = jax.random.PRNGKey(0)
    k_x, k_p, k_x2 = jax.random.split(key, 3)

    batch = 2
    state_size = 8
    action_size = 4  # unused by ValueNet.forward, kept for signature parity

    x = jax.random.normal(k_x, (batch, state_size), dtype=jnp.float32)
    params = init_params(k_p, state_size)

    out = jax.block_until_ready(value_net_forward(x, *params))
    assert out.shape == (batch, 1)

    # Semantic check vs f32 reference (only layer 2 uses bf16 MXU operands).
    ref = _reference_f32(x, params)
    assert jnp.allclose(out, ref, atol=5e-2, rtol=5e-2)

    # Exercise the multi-step grid + masked ragged-tail path (B=300, tb=128).
    x_big = jax.random.normal(k_x2, (300, state_size), dtype=jnp.float32)
    out_big = jax.block_until_ready(value_net_forward(x_big, *params, tb=128))
    assert out_big.shape == (300, 1)
    ref_big = _reference_f32(x_big, params)
    assert jnp.allclose(out_big, ref_big, atol=5e-2, rtol=5e-2)

    print("KERNEL_OK")
</pallas_src>

<mosaic_0001>
module attributes {stable_mosaic.version = 11 : i64} {
  func.func @_value_net_kernel(%arg0: i32, %arg1: memref<8x8xf32, #tpu.memory_space<vmem>>, %arg2: memref<8x128xf32, #tpu.memory_space<vmem>>, %arg3: memref<1x128xf32, #tpu.memory_space<vmem>>, %arg4: memref<128x128xbf16, #tpu.memory_space<vmem>>, %arg5: memref<1x128xf32, #tpu.memory_space<vmem>>, %arg6: memref<1x128xf32, #tpu.memory_space<vmem>>, %arg7: memref<1x1xf32, #tpu.memory_space<vmem>>, %arg8: memref<8x1xf32, #tpu.memory_space<vmem>>) attributes {dimension_semantics = [#tpu.dimension_semantics<parallel>], iteration_bounds = array<i64: 1>, scalar_prefetch = 0 : i64, scratch_operands = 0 : i64, tpu.core_type = #tpu.core_type<tc>, window_params = [{transform_indices = @transform_0, window_bounds = array<i64: 8, 8>}, {pipeline_mode = #tpu.pipeline_mode<synchronous>, transform_indices = @transform_1, window_bounds = array<i64: 8, 128>}, {pipeline_mode = #tpu.pipeline_mode<synchronous>, transform_indices = @transform_2, window_bounds = array<i64: 1, 128>}, {pipeline_mode = #tpu.pipeline_mode<synchronous>, transform_indices = @transform_3, window_bounds = array<i64: 128, 128>}, {pipeline_mode = #tpu.pipeline_mode<synchronous>, transform_indices = @transform_4, window_bounds = array<i64: 1, 128>}, {pipeline_mode = #tpu.pipeline_mode<synchronous>, transform_indices = @transform_5, window_bounds = array<i64: 1, 128>}, {pipeline_mode = #tpu.pipeline_mode<synchronous>, transform_indices = @transform_6, window_bounds = array<i64: 1, 1>}, {transform_indices = @transform_7, window_bounds = array<i64: 8, 1>}]} {
    %c0 = arith.constant 0 : index
    %c0_0 = arith.constant 0 : index
    %0 = vector.load %arg1[%c0, %c0_0] : memref<8x8xf32, #tpu.memory_space<vmem>>, vector<8x1xf32>
    %c0_1 = arith.constant 0 : index
    %c0_2 = arith.constant 0 : index
    %1 = vector.load %arg2[%c0_1, %c0_2] : memref<8x128xf32, #tpu.memory_space<vmem>>, vector<1x128xf32>
    %2 = vector.broadcast %0 : vector<8x1xf32> to vector<8x128xf32>
    %3 = vector.broadcast %1 : vector<1x128xf32> to vector<8x128xf32>
    %4 = arith.mulf %2, %3 : vector<8x128xf32>
    %c0_3 = arith.constant 0 : index
    %c1 = arith.constant 1 : index
    %5 = vector.load %arg1[%c0_3, %c1] : memref<8x8xf32, #tpu.memory_space<vmem>>, vector<8x1xf32>
    %c1_4 = arith.constant 1 : index
    %c0_5 = arith.constant 0 : index
    %6 = vector.load %arg2[%c1_4, %c0_5] : memref<8x128xf32, #tpu.memory_space<vmem>>, vector<1x128xf32>
    %7 = vector.broadcast %5 : vector<8x1xf32> to vector<8x128xf32>
    %8 = vector.broadcast %6 : vector<1x128xf32> to vector<8x128xf32>
    %9 = arith.mulf %7, %8 : vector<8x128xf32>
    %10 = arith.addf %4, %9 : vector<8x128xf32>
    %c0_6 = arith.constant 0 : index
    %c2 = arith.constant 2 : index
    %11 = vector.load %arg1[%c0_6, %c2] : memref<8x8xf32, #tpu.memory_space<vmem>>, vector<8x1xf32>
    %c2_7 = arith.constant 2 : index
    %c0_8 = arith.constant 0 : index
    %12 = vector.load %arg2[%c2_7, %c0_8] : memref<8x128xf32, #tpu.memory_space<vmem>>, vector<1x128xf32>
    %13 = vector.broadcast %11 : vector<8x1xf32> to vector<8x128xf32>
    %14 = vector.broadcast %12 : vector<1x128xf32> to vector<8x128xf32>
    %15 = arith.mulf %13, %14 : vector<8x128xf32>
    %16 = arith.addf %10, %15 : vector<8x128xf32>
    %c0_9 = arith.constant 0 : index
    %c3 = arith.constant 3 : index
    %17 = vector.load %arg1[%c0_9, %c3] : memref<8x8xf32, #tpu.memory_space<vmem>>, vector<8x1xf32>
    %c3_10 = arith.constant 3 : index
    %c0_11 = arith.constant 0 : index
    %18 = vector.load %arg2[%c3_10, %c0_11] : memref<8x128xf32, #tpu.memory_space<vmem>>, vector<1x128xf32>
    %19 = vector.broadcast %17 : vector<8x1xf32> to vector<8x128xf32>
    %20 = vector.broadcast %18 : vector<1x128xf32> to vector<8x128xf32>
    %21 = arith.mulf %19, %20 : vector<8x128xf32>
    %22 = arith.addf %16, %21 : vector<8x128xf32>
    %c0_12 = arith.constant 0 : index
    %c4 = arith.constant 4 : index
    %23 = vector.load %arg1[%c0_12, %c4] : memref<8x8xf32, #tpu.memory_space<vmem>>, vector<8x1xf32>
    %c4_13 = arith.constant 4 : index
    %c0_14 = arith.constant 0 : index
    %24 = vector.load %arg2[%c4_13, %c0_14] : memref<8x128xf32, #tpu.memory_space<vmem>>, vector<1x128xf32>
    %25 = vector.broadcast %23 : vector<8x1xf32> to vector<8x128xf32>
    %26 = vector.broadcast %24 : vector<1x128xf32> to vector<8x128xf32>
    %27 = arith.mulf %25, %26 : vector<8x128xf32>
    %28 = arith.addf %22, %27 : vector<8x128xf32>
    %c0_15 = arith.constant 0 : index
    %c5 = arith.constant 5 : index
    %29 = vector.load %arg1[%c0_15, %c5] : memref<8x8xf32, #tpu.memory_space<vmem>>, vector<8x1xf32>
    %c5_16 = arith.constant 5 : index
    %c0_17 = arith.constant 0 : index
    %30 = vector.load %arg2[%c5_16, %c0_17] : memref<8x128xf32, #tpu.memory_space<vmem>>, vector<1x128xf32>
    %31 = vector.broadcast %29 : vector<8x1xf32> to vector<8x128xf32>
    %32 = vector.broadcast %30 : vector<1x128xf32> to vector<8x128xf32>
    %33 = arith.mulf %31, %32 : vector<8x128xf32>
    %34 = arith.addf %28, %33 : vector<8x128xf32>
    %c0_18 = arith.constant 0 : index
    %c6 = arith.constant 6 : index
    %35 = vector.load %arg1[%c0_18, %c6] : memref<8x8xf32, #tpu.memory_space<vmem>>, vector<8x1xf32>
    %c6_19 = arith.constant 6 : index
    %c0_20 = arith.constant 0 : index
    %36 = vector.load %arg2[%c6_19, %c0_20] : memref<8x128xf32, #tpu.memory_space<vmem>>, vector<1x128xf32>
    %37 = vector.broadcast %35 : vector<8x1xf32> to vector<8x128xf32>
    %38 = vector.broadcast %36 : vector<1x128xf32> to vector<8x128xf32>
    %39 = arith.mulf %37, %38 : vector<8x128xf32>
    %40 = arith.addf %34, %39 : vector<8x128xf32>
    %c0_21 = arith.constant 0 : index
    %c7 = arith.constant 7 : index
    %41 = vector.load %arg1[%c0_21, %c7] : memref<8x8xf32, #tpu.memory_space<vmem>>, vector<8x1xf32>
    %c7_22 = arith.constant 7 : index
    %c0_23 = arith.constant 0 : index
    %42 = vector.load %arg2[%c7_22, %c0_23] : memref<8x128xf32, #tpu.memory_space<vmem>>, vector<1x128xf32>
    %43 = vector.broadcast %41 : vector<8x1xf32> to vector<8x128xf32>
    %44 = vector.broadcast %42 : vector<1x128xf32> to vector<8x128xf32>
    %45 = arith.mulf %43, %44 : vector<8x128xf32>
    %46 = arith.addf %40, %45 : vector<8x128xf32>
    %c0_24 = arith.constant 0 : index
    %c0_25 = arith.constant 0 : index
    %47 = vector.load %arg3[%c0_24, %c0_25] : memref<1x128xf32, #tpu.memory_space<vmem>>, vector<1x128xf32>
    %48 = vector.broadcast %47 : vector<1x128xf32> to vector<8x128xf32>
    %49 = arith.addf %46, %48 : vector<8x128xf32>
    %cst = arith.constant 0.000000e+00 : f32
    %50 = vector.broadcast %cst : f32 to vector<8x128xf32>
    %51 = arith.maximumf %49, %50 : vector<8x128xf32>
    %52 = arith.truncf %51 : vector<8x128xf32> to vector<8x128xbf16>
    %c0_26 = arith.constant 0 : index
    %c0_27 = arith.constant 0 : index
    %53 = vector.load %arg4[%c0_26, %c0_27] : memref<128x128xbf16, #tpu.memory_space<vmem>>, vector<128x128xbf16>
    %cst_28 = arith.constant dense<0.000000e+00> : vector<8x128xf32>
    %54 = tpu.matmul %52, %53, %cst_28 {dimension_numbers = #tpu.dot_dimension_numbers<[1], [0], [0], [1], [0, 0, 1, 1], [], []>} : vector<8x128xbf16>, vector<128x128xbf16>, vector<8x128xf32> -> vector<8x128xf32>
    %c0_29 = arith.constant 0 : index
    %c0_30 = arith.constant 0 : index
    %55 = vector.load %arg5[%c0_29, %c0_30] : memref<1x128xf32, #tpu.memory_space<vmem>>, vector<1x128xf32>
    %56 = vector.broadcast %55 : vector<1x128xf32> to vector<8x128xf32>
    %57 = arith.addf %54, %56 : vector<8x128xf32>
    %cst_31 = arith.constant 0.000000e+00 : f32
    %58 = vector.broadcast %cst_31 : f32 to vector<8x128xf32>
    %59 = arith.maximumf %57, %58 : vector<8x128xf32>
    %c0_32 = arith.constant 0 : index
    %c0_33 = arith.constant 0 : index
    %60 = vector.load %arg6[%c0_32, %c0_33] : memref<1x128xf32, #tpu.memory_space<vmem>>, vector<1x128xf32>
    %61 = vector.broadcast %60 : vector<1x128xf32> to vector<8x128xf32>
    %62 = arith.mulf %59, %61 : vector<8x128xf32>
    %cst_34 = arith.constant dense<0.000000e+00> : vector<8xf32>
    %63 = vector.multi_reduction <add>, %62, %cst_34 [1] : vector<8x128xf32> to vector<8xf32>
    %64 = vector.shape_cast %63 : vector<8xf32> to vector<8x1xf32>
    %c0_35 = arith.constant 0 : index
    %c0_36 = arith.constant 0 : index
    %65 = vector.load %arg7[%c0_35, %c0_36] : memref<1x1xf32, #tpu.memory_space<vmem>>, vector<1x1xf32>
    %66 = vector.broadcast %65 : vector<1x1xf32> to vector<8x1xf32>
    %67 = arith.addf %64, %66 : vector<8x1xf32>
    %c0_37 = arith.constant 0 : index
    %c0_38 = arith.constant 0 : index
    %68 = vector.load %arg8[%c0_37, %c0_38] : memref<8x1xf32, #tpu.memory_space<vmem>>, vector<8x1xf32>
    tpu.vector_store %arg8[%c0_37, %c0_38], %67 {strides = array<i32>} : memref<8x1xf32, #tpu.memory_space<vmem>>, vector<8x1xf32>,
    return
  }
  func.func @transform_0(%arg0: i32) -> (i32, i32) {
    %c0_i32 = arith.constant 0 : i32
    %c0_i32_0 = arith.constant 0 : i32
    return %arg0, %c0_i32 : i32, i32
  }
  func.func @transform_1(%arg0: i32) -> (i32, i32) {
    %c0_i32 = arith.constant 0 : i32
    %c0_i32_0 = arith.constant 0 : i32
    %c0_i32_1 = arith.constant 0 : i32
    return %c0_i32, %c0_i32_0 : i32, i32
  }
  func.func @transform_2(%arg0: i32) -> (i32, i32) {
    %c0_i32 = arith.constant 0 : i32
    %c0_i32_0 = arith.constant 0 : i32
    %c0_i32_1 = arith.constant 0 : i32
    return %c0_i32, %c0_i32_0 : i32, i32
  }
  func.func @transform_3(%arg0: i32) -> (i32, i32) {
    %c0_i32 = arith.constant 0 : i32
    %c0_i32_0 = arith.constant 0 : i32
    %c0_i32_1 = arith.constant 0 : i32
    return %c0_i32, %c0_i32_0 : i32, i32
  }
  func.func @transform_4(%arg0: i32) -> (i32, i32) {
    %c0_i32 = arith.constant 0 : i32
    %c0_i32_0 = arith.constant 0 : i32
    %c0_i32_1 = arith.constant 0 : i32
    return %c0_i32, %c0_i32_0 : i32, i32
  }
  func.func @transform_5(%arg0: i32) -> (i32, i32) {
    %c0_i32 = arith.constant 0 : i32
    %c0_i32_0 = arith.constant 0 : i32
    %c0_i32_1 = arith.constant 0 : i32
    return %c0_i32, %c0_i32_0 : i32, i32
  }
  func.func @transform_6(%arg0: i32) -> (i32, i32) {
    %c0_i32 = arith.constant 0 : i32
    %c0_i32_0 = arith.constant 0 : i32
    %c0_i32_1 = arith.constant 0 : i32
    return %c0_i32, %c0_i32_0 : i32, i32
  }
  func.func @transform_7(%arg0: i32) -> (i32, i32) {
    %c0_i32 = arith.constant 0 : i32
    %c0_i32_0 = arith.constant 0 : i32
    return %arg0, %c0_i32 : i32, i32
  }
}

</mosaic_0001>

<llo_original>
// kernel: tpu_custom_call.1
$region0: #{tpu_custom_call.1}
  #allocation0 [shape = 'u32[]', space=smem, size = 0x4, offset = 0x4, fixed_abs, tag = 'smem constant byte address 0x4 - core index']
  #allocation1 [shape = 'u32[144,128]{1,0:T(1,128)}', space=vmem, size = 0x12000, scoped, tag = 'internal scratch']
  #allocation2 [shape = 'f32[1,1]{1,0:T(1,128)S(1)}', space=vmem, size = 0x200, scoped, tag = 'scoped memory for tpu_custom_call.1']
  %s0 = inlined_call_operand.hbm [shape: f32[8,8], index: 0, kind: input, shape index: {}]
  %s1 = inlined_call_operand.hbm [shape: f32[8,128], index: 1, kind: input, shape index: {}]
  %s2 = inlined_call_operand.vmem [shape: f32[1,128], index: 2, kind: input, shape index: {}]
  %s3 = inlined_call_operand.hbm [shape: bf16[128,128], index: 3, kind: input, shape index: {}]
  %s4 = inlined_call_operand.vmem [shape: f32[1,128], index: 4, kind: input, shape index: {}]
  %s5 = inlined_call_operand.vmem [shape: f32[1,128], index: 5, kind: input, shape index: {}]
  %s6 = inlined_call_operand.<no memory space> [shape: f32[1,1], index: 6, kind: input, shape index: {}]
  %s7 = inlined_call_operand.vmem [shape: f32[8,1], index: 7, kind: output, shape index: {}]
  %s8 = sld [smem:[#allocation0]]
  $region50: #{tpu_custom_call.1} parent=0
    _
  %s10 = ssub.s32 1, %s8
  %s11 = scalar_select 0, %s10, %s8
  %v12 = vstv %s6
  %13 = vst [vmem:[#allocation2] sm:$0x1] %v12
  $region1: #{tpu_custom_call.1} parent=0
    #allocation3 [shape = 'u8[4096]{0}', space=vmem, size = 0x1000, scoped, tag = 'input window, operand 0, single buffered']
    #allocation4 [shape = 's32[1]{0}', space=sflag, size = 0x4, scoped, tag = 'scoped memory for tpu_custom_call.1']
    #allocation5 [shape = 'u8[4096]{0}', space=vmem, size = 0x1000, scoped, tag = 'input window, operand 1, single buffered']
    #allocation6 [shape = 's32[1]{0}', space=sflag, size = 0x4, scoped, tag = 'scoped memory for tpu_custom_call.1']
    #allocation7 [shape = 'u8[32768]{0}', space=vmem, size = 0x8000, scoped, tag = 'input window, operand 3, single buffered']
    %14 = vsyncpa [#allocation4], 0
    %15 = vsyncpa [#allocation6], 0
    // Predicated region
    $region2: #{tpu_custom_call.1} parent=1 // pred_check
      _
    $region3: #{tpu_custom_call.1} parent=1 // pred_check_branch
      %17 = sbr.rel (0) target = $region5
    $region4: #{tpu_custom_call.1} parent=1 // pred_region
      %s19 = ssub.s32 128, 128
      %20 = vsyncadd [#allocation4], %s19
      %s22 = sshll.u32 [#allocation3], 4
      %s23 = int_to_ptr.vmem [resolvable:$true] %s22
      %25 = dma.hbm_to_vmem [thread:$0]  %s0, 128, %s23, [#allocation4]
    $region5: #{tpu_custom_call.1} parent=1 // pred_fallthru
      _
    // Predicated region
    $region6: #{tpu_custom_call.1} parent=1 // pred_check
      _
    $region7: #{tpu_custom_call.1} parent=1 // pred_check_branch
      %27 = sbr.rel (0) target = $region9
    $region8: #{tpu_custom_call.1} parent=1 // pred_region
      %s29 = ssub.s32 128, 128
      %30 = vsyncadd [#allocation6], %s29
      %s32 = sshll.u32 [#allocation5], 4
      %s33 = int_to_ptr.vmem [resolvable:$true] %s32
      %35 = dma.hbm_to_vmem [thread:$0]  %s1, 128, %s33, [#allocation6]
    $region9: #{tpu_custom_call.1} parent=1 // pred_fallthru
      _
    // Predicated region
    $region10: #{tpu_custom_call.1} parent=1 // pred_check
      _
    $region11: #{tpu_custom_call.1} parent=1 // pred_check_branch
      %37 = sbr.rel (0) target = $region13
    $region12: #{tpu_custom_call.1} parent=1 // pred_region
      _
    $region13: #{tpu_custom_call.1} parent=1 // pred_fallthru
      _
    // Predicated region
    $region14: #{tpu_custom_call.1} parent=1 // pred_check
      _
    $region15: #{tpu_custom_call.1} parent=1 // pred_check_branch
      %39 = sbr.rel (0) target = $region17
    $region16: #{tpu_custom_call.1} parent=1 // pred_region
      %s41 = ssub.s32 1024, 1024
      %42 = vsyncadd [#allocation6], %s41
      %s43 = sshll.u32 [#allocation7], 4
      %s44 = int_to_ptr.vmem [resolvable:$true] %s43
      %49 = dma.hbm_to_vmem [thread:$0]  %s3, 1024, %s44, [#allocation6], 64, 64, 4
    $region17: #{tpu_custom_call.1} parent=1 // pred_fallthru
      _
    // Predicated region
    $region18: #{tpu_custom_call.1} parent=1 // pred_check
      _
    $region19: #{tpu_custom_call.1} parent=1 // pred_check_branch
      %51 = sbr.rel (0) target = $region21
    $region20: #{tpu_custom_call.1} parent=1 // pred_region
      _
    $region21: #{tpu_custom_call.1} parent=1 // pred_fallthru
      _
    // Predicated region
    $region22: #{tpu_custom_call.1} parent=1 // pred_check
      _
    $region23: #{tpu_custom_call.1} parent=1 // pred_check_branch
      %53 = sbr.rel (0) target = $region25
    $region24: #{tpu_custom_call.1} parent=1 // pred_region
      _
    $region25: #{tpu_custom_call.1} parent=1 // pred_fallthru
      _
    // Predicated region
    $region26: #{tpu_custom_call.1} parent=1 // pred_check
      _
    $region27: #{tpu_custom_call.1} parent=1 // pred_check_branch
      %55 = sbr.rel (0) target = $region29
    $region28: #{tpu_custom_call.1} parent=1 // pred_region
      _
    $region29: #{tpu_custom_call.1} parent=1 // pred_fallthru
      _
    // Predicated region
    $region30: #{tpu_custom_call.1} parent=1 // pred_check
      _
    $region31: #{tpu_custom_call.1} parent=1 // pred_check_branch
      %57 = sbr.rel (0) target = $region33
    $region32: #{tpu_custom_call.1} parent=1 // pred_region
      %58 = dma.done [#allocation4], 128
    $region33: #{tpu_custom_call.1} parent=1 // pred_fallthru
      _
    // Predicated region
    $region34: #{tpu_custom_call.1} parent=1 // pred_check
      _
    $region35: #{tpu_custom_call.1} parent=1 // pred_check_branch
      %60 = sbr.rel (0) target = $region37
    $region36: #{tpu_custom_call.1} parent=1 // pred_region
      %61 = dma.done [#allocation6], 128
    $region37: #{tpu_custom_call.1} parent=1 // pred_fallthru
      _
    // Predicated region
    $region38: #{tpu_custom_call.1} parent=1 // pred_check
      _
    $region39: #{tpu_custom_call.1} parent=1 // pred_check_branch
      %63 = sbr.rel (0) target = $region41
    $region40: #{tpu_custom_call.1} parent=1 // pred_region
      %64 = dma.done [#allocation6], 1024
    $region41: #{tpu_custom_call.1} parent=1 // pred_fallthru
      _
    %v66 = vld [vmem:[#allocation3] sm:$0xff]
    %v67 = vld [vmem:[#allocation5] sm:$0x1]
    %69 = vset.pattern.permute.xlu0 0
    %70 = vperm.xlu0 %69, %v66
    %v71 = vpop.permute.xlu0 %70
    %v73 = vlaneseq
    %v74 = vshrl.u32 %v73, 7
    %v75 = vsub.s32 0, %v74
    %v76 = vrot.slane %v67, %v75
    %v77 = vmul.f32 %v71, %v76
    %v78 = vld [vmem:[#allocation5 + $0x1] sm:$0x1]
    %79 = vset.pattern.permute.xlu0 1
    %80 = vperm.xlu0 %79, %v66
    %v81 = vpop.permute.xlu0 %80
    %v83 = vlaneseq
    %v84 = vshrl.u32 %v83, 7
    %v85 = vsub.s32 0, %v84
    %v86 = vrot.slane %v78, %v85
    %v87 = vmul.f32 %v81, %v86
    %v88 = vadd.f32 %v77, %v87
    %v89 = vld [vmem:[#allocation5 + $0x2] sm:$0x1]
    %90 = vset.pattern.permute.xlu0 2
    %91 = vperm.xlu0 %90, %v66
    %v92 = vpop.permute.xlu0 %91
    %v94 = vlaneseq
    %v95 = vshrl.u32 %v94, 7
    %v96 = vsub.s32 0, %v95
    %v97 = vrot.slane %v89, %v96
    %v98 = vmul.f32 %v92, %v97
    %v99 = vadd.f32 %v88, %v98
    %v100 = vld [vmem:[#allocation5 + $0x3] sm:$0x1]
    %101 = vset.pattern.permute.xlu0 3
    %102 = vperm.xlu0 %101, %v66
    %v103 = vpop.permute.xlu0 %102
    %v105 = vlaneseq
    %v106 = vshrl.u32 %v105, 7
    %v107 = vsub.s32 0, %v106
    %v108 = vrot.slane %v100, %v107
    %v109 = vmul.f32 %v103, %v108
    %v110 = vadd.f32 %v99, %v109
    %v111 = vld [vmem:[#allocation5 + $0x4] sm:$0x1]
    %112 = vset.pattern.permute.xlu0 4
    %113 = vperm.xlu0 %112, %v66
    %v114 = vpop.permute.xlu0 %113
    %v116 = vlaneseq
    %v117 = vshrl.u32 %v116, 7
    %v118 = vsub.s32 0, %v117
    %v119 = vrot.slane %v111, %v118
    %v120 = vmul.f32 %v114, %v119
    %v121 = vadd.f32 %v110, %v120
    %v122 = vld [vmem:[#allocation5 + $0x5] sm:$0x1]
    %123 = vset.pattern.permute.xlu0 5
    %124 = vperm.xlu0 %123, %v66
    %v125 = vpop.permute.xlu0 %124
    %v127 = vlaneseq
    %v128 = vshrl.u32 %v127, 7
    %v129 = vsub.s32 0, %v128
    %v130 = vrot.slane %v122, %v129
    %v131 = vmul.f32 %v125, %v130
    %v132 = vadd.f32 %v121, %v131
    %v133 = vld [vmem:[#allocation5 + $0x6] sm:$0x1]
    %134 = vset.pattern.permute.xlu0 6
    %135 = vperm.xlu0 %134, %v66
    %v136 = vpop.permute.xlu0 %135
    %v138 = vlaneseq
    %v139 = vshrl.u32 %v138, 7
    %v140 = vsub.s32 0, %v139
    %v141 = vrot.slane %v133, %v140
    %v142 = vmul.f32 %v136, %v141
    %v143 = vadd.f32 %v132, %v142
    %v144 = vld [vmem:[#allocation5 + $0x7] sm:$0x1]
    %145 = vset.pattern.permute.xlu0 7
    %146 = vperm.xlu0 %145, %v66
    %v147 = vpop.permute.xlu0 %146
    %v149 = vlaneseq
    %v150 = vshrl.u32 %v149, 7
    %v151 = vsub.s32 0, %v150
    %v152 = vrot.slane %v144, %v151
    %v153 = vmul.f32 %v147, %v152
    %v154 = vadd.f32 %v143, %v153
    %v155 = vld [vmem:[%s2] sm:$0x1]
    %v157 = vlaneseq
    %v158 = vshrl.u32 %v157, 7
    %v159 = vsub.s32 0, %v158
    %v160 = vrot.slane %v155, %v159
    %v162 = vadd.f32 %v154, %v160
    %v163 = vmax.f32 %v162, 0.0
    %v164 = vpack.c.bf16 %v163, %v163
    %v165 = vld [vmem:[#allocation7] sm:$0xf]
    %v166 = vld [vmem:[#allocation7 + $0x4] sm:$0xf]
    %v167 = vld [vmem:[#allocation7 + $0x8] sm:$0xf]
    %v168 = vld [vmem:[#allocation7 + $0xc] sm:$0xf]
    %v169 = vld [vmem:[#allocation7 + $0x10] sm:$0xf]
    %v170 = vld [vmem:[#allocation7 + $0x14] sm:$0xf]
    %v171 = vld [vmem:[#allocation7 + $0x18] sm:$0xf]
    %v172 = vld [vmem:[#allocation7 + $0x1c] sm:$0xf]
    %v173 = vld [vmem:[#allocation7 + $0x20] sm:$0xf]
    %v174 = vld [vmem:[#allocation7 + $0x24] sm:$0xf]
    %v175 = vld [vmem:[#allocation7 + $0x28] sm:$0xf]
    %v176 = vld [vmem:[#allocation7 + $0x2c] sm:$0xf]
    %v177 = vld [vmem:[#allocation7 + $0x30] sm:$0xf]
    %v178 = vld [vmem:[#allocation7 + $0x34] sm:$0xf]
    %v179 = vld [vmem:[#allocation7 + $0x38] sm:$0xf]
    %v180 = vld [vmem:[#allocation7 + $0x3c] sm:$0xf]
    %v181 = vld [vmem:[%s4] sm:$0x1]
    %v183 = vlaneseq
    %v184 = vshrl.u32 %v183, 7
    %v185 = vsub.s32 0, %v184
    %v186 = vrot.slane %v181, %v185
    %v204 = vunpack.c.l.b16 %v165
    %v205 = vunpack.c.l.b16 %v166
    %v206 = vunpack.c.l.b16 %v167
    %v207 = vunpack.c.l.b16 %v168
    %v208 = vunpack.c.l.b16 %v169
    %v209 = vunpack.c.l.b16 %v170
    %v210 = vunpack.c.l.b16 %v171
    %v211 = vunpack.c.l.b16 %v172
    %v212 = vunpack.c.l.b16 %v173
    %v213 = vunpack.c.l.b16 %v174
    %v214 = vunpack.c.l.b16 %v175
    %v215 = vunpack.c.l.b16 %v176
    %v216 = vunpack.c.l.b16 %v177
    %v217 = vunpack.c.l.b16 %v178
    %v218 = vunpack.c.l.b16 %v179
    %v219 = vunpack.c.l.b16 %v180
    %v220 = vpack.c.b16 %v205, %v204
    %v221 = vpack.c.b16 %v207, %v206
    %v222 = vpack.c.b16 %v209, %v208
    %v223 = vpack.c.b16 %v211, %v210
    %v224 = vpack.c.b16 %v213, %v212
    %v225 = vpack.c.b16 %v215, %v214
    %v226 = vpack.c.b16 %v217, %v216
    %v227 = vpack.c.b16 %v219, %v218
    %236 = vmatprep.subr.bf16.mxu0 0
    %237 = vmatpush1.bf16.msra.mxu0 %v220
    %238 = vmatprep.subr.bf16.mxu0 0
    %239 = vmatpush1.bf16.msra.mxu0 %v221
    %240 = vmatprep.subr.bf16.mxu0 0
    %241 = vmatpush1.bf16.msra.mxu0 %v222
    %242 = vmatprep.subr.bf16.mxu0 0
    %243 = vmatpush1.bf16.msra.mxu0 %v223
    %244 = vmatprep.subr.bf16.mxu0 0
    %245 = vmatpush1.bf16.msra.mxu0 %v224
    %246 = vmatprep.subr.bf16.mxu0 0
    %247 = vmatpush1.bf16.msra.mxu0 %v225
    %248 = vmatprep.subr.bf16.mxu0 0
    %249 = vmatpush1.bf16.msra.mxu0 %v226
    %250 = vmatprep.subr.bf16.mxu0 0
    %251 = vmatpush1.bf16.msra.mxu0 %v227
    %252 = vmatprep.subr.bf16.mxu0 0
    %253 = vmatpush1.bf16.msra.mxu0 0
    %254 = vmatprep.subr.bf16.mxu0 0
    %255 = vmatpush1.bf16.msra.mxu0 0
    %256 = vmatprep.subr.bf16.mxu0 0
    %257 = vmatpush1.bf16.msra.mxu0 0
    %258 = vmatprep.subr.bf16.mxu0 0
    %259 = vmatpush1.bf16.msra.mxu0 0
    %260 = vmatprep.subr.bf16.mxu0 0
    %261 = vmatpush1.bf16.msra.mxu0 0
    %262 = vmatprep.subr.bf16.mxu0 0
    %263 = vmatpush1.bf16.msra.mxu0 0
    %264 = vmatprep.subr.bf16.mxu0 0
    %265 = vmatpush1.bf16.msra.mxu0 0
    %266 = vmatprep.subr.bf16.mxu0 0
    %267 = vmatpush1.bf16.msra.mxu0 0
    %268 = vmatprep.mubr.bf16.mxu0 0
    %269 = vmatmul.mubr.bf16.gmra.mrb[0].mxu0 %v164
    %v270 = vpop.f32.mrb[0].mxu0
    %v271 = vadd.f32 %v186, %v270
    %v272 = vpop.f32.mrb[0].mxu0
    %v273 = vpop.f32.mrb[0].mxu0
    %v274 = vpop.f32.mrb[0].mxu0
    %275 = vdwg.mxu0
    %v276 = vmax.f32 %v271, 0.0
    %v277 = vld [vmem:[%s5] sm:$0x1]
    %v279 = vlaneseq
    %v280 = vshrl.u32 %v279, 7
    %v281 = vsub.s32 0, %v280
    %v282 = vrot.slane %v277, %v281
    %v284 = vmul.f32 %v276, %v282
    %285 = vadd.xlane.f32.xlu0 %v284
    %v286 = vpop.xlane.xlu0 %285
    %v287 = vld [vmem:[#allocation2] sm:$0x1]
    %v289 = vlaneseq
    %v290 = vshrl.u32 %v289, 7
    %v291 = vsub.s32 0, %v290
    %v292 = vrot.slane %v287, %v291
    %v294 = vadd.f32 %v286, %v292
    %vm295 = vcmask 7168
    %296 = vst.msk [vmem:[%s7] sm:$0xff] %vm295, %v294
    // Predicated region
    $region42: #{tpu_custom_call.1} parent=1 // pred_check
      _
    $region43: #{tpu_custom_call.1} parent=1 // pred_check_branch
      %298 = sbr.rel (0) target = $region45
    $region44: #{tpu_custom_call.1} parent=1 // pred_region
      _
    $region45: #{tpu_custom_call.1} parent=1 // pred_fallthru
      _
    // Predicated region
    $region46: #{tpu_custom_call.1} parent=1 // pred_check
      _
    $region47: #{tpu_custom_call.1} parent=1 // pred_check_branch
      %300 = sbr.rel (0) target = $region49
    $region48: #{tpu_custom_call.1} parent=1 // pred_region
      _
    $region49: #{tpu_custom_call.1} parent=1 // pred_fallthru
      _
    %301 = vsyncpa [#allocation4], 1
    %302 = vsyncpa [#allocation6], 1

</llo_original>
